<compile_context>
chip_gen: v6e
topology: v6e:2x2x1
jax: 0.10.0
libtpu: 0.0.40
codegen_flags: <defaults>
</compile_context>

<pallas_src>
import jax
import jax.numpy as jnp
from jax import lax
from jax.experimental import pallas as pl
from jax.experimental.pallas import tpu as pltpu

IN_FEATURES = 123
OUT_FEATURES = 16
LN_EPS = 1e-5
INV_OUT = 1.0 / OUT_FEATURES
TB_MAX = 1024  # batch rows per grid step (sized well under v7x's 64 MiB VMEM)


def static_unnum_kernel(x_ref, w_ref, b_ref, gamma_ref, beta_ref, o_ref):
    # ---- Linear: (TB, in) @ (in, out) + (1, out) on the MXU ----
    y = jnp.dot(x_ref[...], w_ref[...], preferred_element_type=jnp.float32)
    y = y + b_ref[...]                                # broadcast (1, out)

    # ---- LayerNorm over last dim (out_features) ----
    mean = jnp.sum(y, axis=-1, keepdims=True) * INV_OUT        # XLU reduce
    centered = y - mean
    var = jnp.sum(centered * centered, axis=-1, keepdims=True) * INV_OUT
    scale = lax.rsqrt(var + LN_EPS) * gamma_ref[...]           # EUP rsqrt, fused gamma
    o_ref[...] = (centered * scale + beta_ref[...]).astype(o_ref.dtype)


def _choose_tile(batch):
    # Second-to-last block dim must be a multiple of 8 or equal the full dim.
    if batch <= TB_MAX:
        return batch
    return TB_MAX  # multiple of 8; Pallas masks the (possibly partial) last tile


def static_unnum_forward(x, weight, bias, gamma, beta):
    """x: (B, 123) f32. weight: (123, 16). bias/gamma/beta: (16,)."""
    B = x.shape[0]
    tb = _choose_tile(B)
    grid = (pl.cdiv(B, tb),)

    # Keep 1-D params as (1, out) rows so they live cleanly in VMEM tiles.
    bias2 = bias.reshape(1, OUT_FEATURES)
    gamma2 = gamma.reshape(1, OUT_FEATURES)
    beta2 = beta.reshape(1, OUT_FEATURES)

    # Constant-index blocks (weight / bias / gamma / beta) stay resident in
    # VMEM; x / out are pipelined over the batch grid axis.
    x_spec = pl.BlockSpec((tb, IN_FEATURES), lambda i: (i, 0))
    w_spec = pl.BlockSpec((IN_FEATURES, OUT_FEATURES), lambda i: (0, 0))
    p_spec = pl.BlockSpec((1, OUT_FEATURES), lambda i: (0, 0))
    o_spec = pl.BlockSpec((tb, OUT_FEATURES), lambda i: (i, 0))

    return pl.pallas_call(
        static_unnum_kernel,
        out_shape=jax.ShapeDtypeStruct((B, OUT_FEATURES), x.dtype),
        grid=grid,
        in_specs=[x_spec, w_spec, p_spec, p_spec, p_spec],
        out_specs=o_spec,
        compiler_params=pltpu.CompilerParams(
            dimension_semantics=("parallel",)),
    )(x, weight, bias2, gamma2, beta2)


def reference_forward(x, weight, bias, gamma, beta):
    y = x @ weight + bias
    mean = jnp.mean(y, axis=-1, keepdims=True)
    var = jnp.mean((y - mean) ** 2, axis=-1, keepdims=True)
    yn = (y - mean) / jnp.sqrt(var + LN_EPS)
    return yn * gamma + beta


if __name__ == "__main__":
    key = jax.random.PRNGKey(0)
    k_x, k_w, k_b, k_g, k_bt = jax.random.split(key, 5)

    B = 8
    x = jax.random.normal(k_x, (B, IN_FEATURES), dtype=jnp.float32)

    # Deterministic parameter init (shapes from nn.Linear(123,16), nn.LayerNorm(16)).
    bound = 1.0 / (IN_FEATURES ** 0.5)
    weight = jax.random.uniform(
        k_w, (IN_FEATURES, OUT_FEATURES), minval=-bound, maxval=bound,
        dtype=jnp.float32)
    bias = jax.random.uniform(
        k_b, (OUT_FEATURES,), minval=-bound, maxval=bound, dtype=jnp.float32)
    gamma = jnp.ones((OUT_FEATURES,), dtype=jnp.float32)   # LayerNorm weight init
    beta = jnp.zeros((OUT_FEATURES,), dtype=jnp.float32)   # LayerNorm bias init

    out = static_unnum_forward(x, weight, bias, gamma, beta)
    out = jax.block_until_ready(out)

    ref = reference_forward(x, weight, bias, gamma, beta)
    assert out.shape == (B, OUT_FEATURES)
    assert jnp.allclose(out, ref, atol=2e-5, rtol=2e-5), "mismatch vs reference"

    print("KERNEL_OK")
</pallas_src>

<mosaic_0001>
module attributes {stable_mosaic.version = 11 : i64} {
  func.func @static_unnum_kernel(%arg0: i32, %arg1: memref<8x123xf32, #tpu.memory_space<vmem>>, %arg2: memref<123x16xf32, #tpu.memory_space<vmem>>, %arg3: memref<1x16xf32, #tpu.memory_space<vmem>>, %arg4: memref<1x16xf32, #tpu.memory_space<vmem>>, %arg5: memref<1x16xf32, #tpu.memory_space<vmem>>, %arg6: memref<8x16xf32, #tpu.memory_space<vmem>>) attributes {dimension_semantics = [#tpu.dimension_semantics<parallel>], iteration_bounds = array<i64: 1>, scalar_prefetch = 0 : i64, scratch_operands = 0 : i64, tpu.core_type = #tpu.core_type<tc>, window_params = [{transform_indices = @transform_0, window_bounds = array<i64: 8, 123>}, {pipeline_mode = #tpu.pipeline_mode<synchronous>, transform_indices = @transform_1, window_bounds = array<i64: 123, 16>}, {pipeline_mode = #tpu.pipeline_mode<synchronous>, transform_indices = @transform_2, window_bounds = array<i64: 1, 16>}, {pipeline_mode = #tpu.pipeline_mode<synchronous>, transform_indices = @transform_3, window_bounds = array<i64: 1, 16>}, {pipeline_mode = #tpu.pipeline_mode<synchronous>, transform_indices = @transform_4, window_bounds = array<i64: 1, 16>}, {transform_indices = @transform_5, window_bounds = array<i64: 8, 16>}]} {
    %c0 = arith.constant 0 : index
    %c0_0 = arith.constant 0 : index
    %0 = vector.load %arg1[%c0, %c0_0] : memref<8x123xf32, #tpu.memory_space<vmem>>, vector<8x123xf32>
    %c0_1 = arith.constant 0 : index
    %c0_2 = arith.constant 0 : index
    %1 = vector.load %arg2[%c0_1, %c0_2] : memref<123x16xf32, #tpu.memory_space<vmem>>, vector<123x16xf32>
    %cst = arith.constant dense<0.000000e+00> : vector<8x16xf32>
    %2 = tpu.matmul %0, %1, %cst {dimension_numbers = #tpu.dot_dimension_numbers<[1], [0], [0], [1], [0, 0, 1, 1], [], []>} : vector<8x123xf32>, vector<123x16xf32>, vector<8x16xf32> -> vector<8x16xf32>
    %c0_3 = arith.constant 0 : index
    %c0_4 = arith.constant 0 : index
    %3 = vector.load %arg3[%c0_3, %c0_4] : memref<1x16xf32, #tpu.memory_space<vmem>>, vector<1x16xf32>
    %4 = vector.broadcast %3 : vector<1x16xf32> to vector<8x16xf32>
    %5 = arith.addf %2, %4 : vector<8x16xf32>
    %cst_5 = arith.constant dense<0.000000e+00> : vector<8xf32>
    %6 = vector.multi_reduction <add>, %5, %cst_5 [1] : vector<8x16xf32> to vector<8xf32>
    %7 = vector.shape_cast %6 : vector<8xf32> to vector<8x1xf32>
    %cst_6 = arith.constant 6.250000e-02 : f32
    %8 = vector.broadcast %cst_6 : f32 to vector<8x1xf32>
    %9 = arith.mulf %7, %8 : vector<8x1xf32>
    %10 = vector.broadcast %9 : vector<8x1xf32> to vector<8x16xf32>
    %11 = arith.subf %5, %10 : vector<8x16xf32>
    %12 = arith.mulf %11, %11 : vector<8x16xf32>
    %cst_7 = arith.constant dense<0.000000e+00> : vector<8xf32>
    %13 = vector.multi_reduction <add>, %12, %cst_7 [1] : vector<8x16xf32> to vector<8xf32>
    %14 = vector.shape_cast %13 : vector<8xf32> to vector<8x1xf32>
    %cst_8 = arith.constant 6.250000e-02 : f32
    %15 = vector.broadcast %cst_8 : f32 to vector<8x1xf32>
    %16 = arith.mulf %14, %15 : vector<8x1xf32>
    %cst_9 = arith.constant 9.99999974E-6 : f32
    %17 = vector.broadcast %cst_9 : f32 to vector<8x1xf32>
    %18 = arith.addf %16, %17 : vector<8x1xf32>
    %19 = math.rsqrt %18 : vector<8x1xf32>
    %c0_10 = arith.constant 0 : index
    %c0_11 = arith.constant 0 : index
    %20 = vector.load %arg4[%c0_10, %c0_11] : memref<1x16xf32, #tpu.memory_space<vmem>>, vector<1x16xf32>
    %21 = vector.broadcast %19 : vector<8x1xf32> to vector<8x16xf32>
    %22 = vector.broadcast %20 : vector<1x16xf32> to vector<8x16xf32>
    %23 = arith.mulf %21, %22 : vector<8x16xf32>
    %24 = arith.mulf %11, %23 : vector<8x16xf32>
    %c0_12 = arith.constant 0 : index
    %c0_13 = arith.constant 0 : index
    %25 = vector.load %arg5[%c0_12, %c0_13] : memref<1x16xf32, #tpu.memory_space<vmem>>, vector<1x16xf32>
    %26 = vector.broadcast %25 : vector<1x16xf32> to vector<8x16xf32>
    %27 = arith.addf %24, %26 : vector<8x16xf32>
    %c0_14 = arith.constant 0 : index
    %c0_15 = arith.constant 0 : index
    %28 = vector.load %arg6[%c0_14, %c0_15] : memref<8x16xf32, #tpu.memory_space<vmem>>, vector<8x16xf32>
    tpu.vector_store %arg6[%c0_14, %c0_15], %27 {strides = array<i32>} : memref<8x16xf32, #tpu.memory_space<vmem>>, vector<8x16xf32>,
    return
  }
  func.func @transform_0(%arg0: i32) -> (i32, i32) {
    %c0_i32 = arith.constant 0 : i32
    %c0_i32_0 = arith.constant 0 : i32
    return %arg0, %c0_i32 : i32, i32
  }
  func.func @transform_1(%arg0: i32) -> (i32, i32) {
    %c0_i32 = arith.constant 0 : i32
    %c0_i32_0 = arith.constant 0 : i32
    %c0_i32_1 = arith.constant 0 : i32
    return %c0_i32, %c0_i32_0 : i32, i32
  }
  func.func @transform_2(%arg0: i32) -> (i32, i32) {
    %c0_i32 = arith.constant 0 : i32
    %c0_i32_0 = arith.constant 0 : i32
    %c0_i32_1 = arith.constant 0 : i32
    return %c0_i32, %c0_i32_0 : i32, i32
  }
  func.func @transform_3(%arg0: i32) -> (i32, i32) {
    %c0_i32 = arith.constant 0 : i32
    %c0_i32_0 = arith.constant 0 : i32
    %c0_i32_1 = arith.constant 0 : i32
    return %c0_i32, %c0_i32_0 : i32, i32
  }
  func.func @transform_4(%arg0: i32) -> (i32, i32) {
    %c0_i32 = arith.constant 0 : i32
    %c0_i32_0 = arith.constant 0 : i32
    %c0_i32_1 = arith.constant 0 : i32
    return %c0_i32, %c0_i32_0 : i32, i32
  }
  func.func @transform_5(%arg0: i32) -> (i32, i32) {
    %c0_i32 = arith.constant 0 : i32
    %c0_i32_0 = arith.constant 0 : i32
    return %arg0, %c0_i32 : i32, i32
  }
}

</mosaic_0001>

<llo_original>
// kernel: tpu_custom_call.1
$region0: #{tpu_custom_call.1}
  #allocation0 [shape = 'u32[]', space=smem, size = 0x4, offset = 0x4, fixed_abs, tag = 'smem constant byte address 0x4 - core index']
  #allocation1 [shape = 'u32[144,128]{1,0:T(1,128)}', space=vmem, size = 0x12000, scoped, tag = 'internal scratch']
  %s0 = inlined_call_operand.vmem [shape: f32[8,123], index: 0, kind: input, shape index: {}]
  %s1 = inlined_call_operand.vmem [shape: f32[123,16], index: 1, kind: input, shape index: {}]
  %s2 = inlined_call_operand.vmem [shape: f32[1,16], index: 2, kind: input, shape index: {}]
  %s3 = inlined_call_operand.vmem [shape: f32[1,16], index: 3, kind: input, shape index: {}]
  %s4 = inlined_call_operand.vmem [shape: f32[1,16], index: 4, kind: input, shape index: {}]
  %s5 = inlined_call_operand.hbm [shape: f32[8,16], index: 5, kind: output, shape index: {}]
  %s6 = sld [smem:[#allocation0]]
  $region30: #{tpu_custom_call.1} parent=0
    _
  %s8 = ssub.s32 1, %s6
  %s9 = scalar_select 0, %s8, %s6
  $region1: #{tpu_custom_call.1} parent=0
    #allocation2 [shape = 'u8[4096]{0}', space=vmem, size = 0x1000, scoped, tag = 'output window, operand 0, single buffered']
    #allocation3 [shape = 's32[1]{0}', space=sflag, size = 0x4, scoped, tag = 'scoped memory for tpu_custom_call.1']
    %10 = vsyncpa [#allocation3], 0
    // Predicated region
    $region2: #{tpu_custom_call.1} parent=1 // pred_check
      _
    $region3: #{tpu_custom_call.1} parent=1 // pred_check_branch
      %12 = sbr.rel (0) target = $region5
    $region4: #{tpu_custom_call.1} parent=1 // pred_region
      _
    $region5: #{tpu_custom_call.1} parent=1 // pred_fallthru
      _
    // Predicated region
    $region6: #{tpu_custom_call.1} parent=1 // pred_check
      _
    $region7: #{tpu_custom_call.1} parent=1 // pred_check_branch
      %14 = sbr.rel (0) target = $region9
    $region8: #{tpu_custom_call.1} parent=1 // pred_region
      _
    $region9: #{tpu_custom_call.1} parent=1 // pred_fallthru
      _
    // Predicated region
    $region10: #{tpu_custom_call.1} parent=1 // pred_check
      _
    $region11: #{tpu_custom_call.1} parent=1 // pred_check_branch
      %16 = sbr.rel (0) target = $region13
    $region12: #{tpu_custom_call.1} parent=1 // pred_region
      _
    $region13: #{tpu_custom_call.1} parent=1 // pred_fallthru
      _
    // Predicated region
    $region14: #{tpu_custom_call.1} parent=1 // pred_check
      _
    $region15: #{tpu_custom_call.1} parent=1 // pred_check_branch
      %18 = sbr.rel (0) target = $region17
    $region16: #{tpu_custom_call.1} parent=1 // pred_region
      _
    $region17: #{tpu_custom_call.1} parent=1 // pred_fallthru
      _
    // Predicated region
    $region18: #{tpu_custom_call.1} parent=1 // pred_check
      _
    $region19: #{tpu_custom_call.1} parent=1 // pred_check_branch
      %20 = sbr.rel (0) target = $region21
    $region20: #{tpu_custom_call.1} parent=1 // pred_region
      _
    $region21: #{tpu_custom_call.1} parent=1 // pred_fallthru
      _
    %v21 = vld [vmem:[%s0] sm:$0xff]
    %v22 = vld [vmem:[%s1] sm:$0xff]
    %v23 = vld [vmem:[%s1 + $0x8] sm:$0xff]
    %v24 = vld [vmem:[%s1 + $0x10] sm:$0xff]
    %v25 = vld [vmem:[%s1 + $0x18] sm:$0xff]
    %v26 = vld [vmem:[%s1 + $0x20] sm:$0xff]
    %v27 = vld [vmem:[%s1 + $0x28] sm:$0xff]
    %v28 = vld [vmem:[%s1 + $0x30] sm:$0xff]
    %v29 = vld [vmem:[%s1 + $0x38] sm:$0xff]
    %v30 = vld [vmem:[%s1 + $0x40] sm:$0xff]
    %v31 = vld [vmem:[%s1 + $0x48] sm:$0xff]
    %v32 = vld [vmem:[%s1 + $0x50] sm:$0xff]
    %v33 = vld [vmem:[%s1 + $0x58] sm:$0xff]
    %v34 = vld [vmem:[%s1 + $0x60] sm:$0xff]
    %v35 = vld [vmem:[%s1 + $0x68] sm:$0xff]
    %v36 = vld [vmem:[%s1 + $0x70] sm:$0xff]
    %v37 = vld [vmem:[%s1 + $0x78] sm:$0x7]
    %v38 = vld [vmem:[%s2] sm:$0x1]
    %v40 = vlaneseq
    %v41 = vshrl.u32 %v40, 7
    %v42 = vsub.s32 0, %v41
    %v43 = vrot.slane %v38, %v42
    %vm45 = vcmask 1006592
    %v47 = vsel %vm45, %v21, 0
    %vm49 = vcmask 1042432
    %v51 = vsel %vm49, %v37, 0
    %53 = vmatprep.subr.mxu0 0.0
    %54 = vmatpush1.msra.mxu0 %v51
    %55 = vmatprep.subr.mxu0 0.0
    %56 = vmatpush1.msra.mxu0 %v36
    %57 = vmatprep.subr.mxu0 0.0
    %58 = vmatpush1.msra.mxu0 %v35
    %59 = vmatprep.subr.mxu0 0.0
    %60 = vmatpush1.msra.mxu0 %v34
    %61 = vmatprep.subr.mxu0 0.0
    %62 = vmatpush1.msra.mxu0 %v33
    %63 = vmatprep.subr.mxu0 0.0
    %64 = vmatpush1.msra.mxu0 %v32
    %65 = vmatprep.subr.mxu0 0.0
    %66 = vmatpush1.msra.mxu0 %v31
    %67 = vmatprep.subr.mxu0 0.0
    %68 = vmatpush1.msra.mxu0 %v30
    %69 = vmatprep.subr.mxu0 0.0
    %70 = vmatpush1.msra.mxu0 %v29
    %71 = vmatprep.subr.mxu0 0.0
    %72 = vmatpush1.msra.mxu0 %v28
    %73 = vmatprep.subr.mxu0 0.0
    %74 = vmatpush1.msra.mxu0 %v27
    %75 = vmatprep.subr.mxu0 0.0
    %76 = vmatpush1.msra.mxu0 %v26
    %77 = vmatprep.subr.mxu0 0.0
    %78 = vmatpush1.msra.mxu0 %v25
    %79 = vmatprep.subr.mxu0 0.0
    %80 = vmatpush1.msra.mxu0 %v24
    %81 = vmatprep.subr.mxu0 0.0
    %82 = vmatpush1.msra.mxu0 %v23
    %83 = vmatprep.subr.mxu0 0.0
    %84 = vmatpush1.msra.mxu0 %v22
    %85 = vmatprep.subr.mxu0 0.0
    %86 = vmatpush2.msra.mxu0 0.0
    %87 = vmatprep.subr.mxu0 0.0
    %88 = vmatpush2.msra.mxu0 0.0
    %89 = vmatprep.subr.mxu0 0.0
    %90 = vmatpush2.msra.mxu0 0.0
    %91 = vmatprep.subr.mxu0 0.0
    %92 = vmatpush2.msra.mxu0 0.0
    %93 = vmatprep.subr.mxu0 0.0
    %94 = vmatpush2.msra.mxu0 0.0
    %95 = vmatprep.subr.mxu0 0.0
    %96 = vmatpush2.msra.mxu0 0.0
    %97 = vmatprep.subr.mxu0 0.0
    %98 = vmatpush2.msra.mxu0 0.0
    %99 = vmatprep.subr.mxu0 0.0
    %100 = vmatpush2.msra.mxu0 0.0
    %101 = vmatprep.subr.mxu0 0.0
    %102 = vmatpush2.msra.mxu0 0.0
    %103 = vmatprep.subr.mxu0 0.0
    %104 = vmatpush2.msra.mxu0 0.0
    %105 = vmatprep.subr.mxu0 0.0
    %106 = vmatpush2.msra.mxu0 0.0
    %107 = vmatprep.subr.mxu0 0.0
    %108 = vmatpush2.msra.mxu0 0.0
    %109 = vmatprep.subr.mxu0 0.0
    %110 = vmatpush2.msra.mxu0 0.0
    %111 = vmatprep.subr.mxu0 0.0
    %112 = vmatpush2.msra.mxu0 0.0
    %113 = vmatprep.subr.mxu0 0.0
    %114 = vmatpush2.msra.mxu0 0.0
    %115 = vmatprep.subr.mxu0 0.0
    %116 = vmatpush2.msra.mxu0 0.0
    %117 = vmatprep.mubr.f32.mxu0 0.0
    %118 = vmatmul.mubr.f32.gmra.mxu0 %v47
    %v119 = vpop.f32.mrf.mxu0
    %v120 = vadd.f32 %v43, %v119
    %v121 = vpop.f32.mrf.mxu0
    %122 = vdwg.mxu0
    %vm123 = vcmask 130048
    %v124 = vsel %vm123, %v120, 0.0
    %125 = vadd.xlane.f32.xlu0 %v124
    %v126 = vpop.xlane.xlu0 %125
    %v127 = vmul.f32 %v126, 0.0625
    %v128 = vsub.f32 %v120, %v127
    %v129 = vmul.f32 %v128, %v128
    %v130 = vsel %vm123, %v129, 0.0
    %131 = vadd.xlane.f32.xlu0 %v130
    %v132 = vpop.xlane.xlu0 %131
    %v133 = vmul.f32 %v132, 0.0625
    %v134 = vadd.f32 %v133, 1e-05
    %v135 = vrsqrt.pop %v134
    %v136 = vld [vmem:[%s3] sm:$0x1]
    %v138 = vlaneseq
    %v139 = vshrl.u32 %v138, 7
    %v140 = vsub.s32 0, %v139
    %v141 = vrot.slane %v136, %v140
    %v143 = vmul.f32 %v135, %v141
    %v144 = vmul.f32 %v128, %v143
    %v145 = vld [vmem:[%s4] sm:$0x1]
    %v147 = vlaneseq
    %v148 = vshrl.u32 %v147, 7
    %v149 = vsub.s32 0, %v148
    %v150 = vrot.slane %v145, %v149
    %v152 = vadd.f32 %v144, %v150
    %153 = vst.msk [vmem:[#allocation2] sm:$0xff] %vm123, %v152
    // Predicated region
    $region22: #{tpu_custom_call.1} parent=1 // pred_check
      _
    $region23: #{tpu_custom_call.1} parent=1 // pred_check_branch
      %155 = sbr.rel (0) target = $region25
    $region24: #{tpu_custom_call.1} parent=1 // pred_region
      %s157 = ssub.s32 128, 128
      %158 = vsyncadd [#allocation3], %s157
      %s160 = sshll.u32 [#allocation2], 4
      %s161 = int_to_ptr.vmem [resolvable:$true] %s160
      %163 = dma.vmem_to_hbm [thread:$0]  %s161, 128, %s5, [#allocation3]
    $region25: #{tpu_custom_call.1} parent=1 // pred_fallthru
      _
    // Predicated region
    $region26: #{tpu_custom_call.1} parent=1 // pred_check
      _
    $region27: #{tpu_custom_call.1} parent=1 // pred_check_branch
      %165 = sbr.rel (0) target = $region29
    $region28: #{tpu_custom_call.1} parent=1 // pred_region
      %166 = dma.done [#allocation3], 128
    $region29: #{tpu_custom_call.1} parent=1 // pred_fallthru
      _
    %167 = vsyncpa [#allocation3], 1

</llo_original>
